<compile_context>
chip_gen: v7x
topology: tpu7x:2x2x1
jax: 0.10.0
libtpu: 0.0.40
codegen_flags: <defaults>
</compile_context>

<pallas_src>
import jax
import jax.numpy as jnp
from jax.experimental import pallas as pl
from jax.experimental.pallas import tpu as pltpu

HIDDEN = 32
VOCAB_SIZES = (52, 13, 32, 8)       # year, month, day, weekday
SLAB_SIZES = (56, 16, 32, 8)        # vocab sizes rounded up to 8 (sublane-aligned)
SLAB_OFFSETS = (0, 56, 72, 104)     # slab start rows inside the combined table
TOTAL_SLAB = 112                    # sum(SLAB_SIZES)
COMBINED_VOCAB = 128                # padded to one full lane group


def date_emb_kernel(idx_ref, table_t_ref, out_ref, onehot_ref):
    """One row-tile of the fused 4-way embedding lookup.

    idx_ref:     (4, tile)   int32  raw field values; fields on sublanes, rows lane-dense
    table_t_ref: (H, 128)    f32    transposed combined table (grid-resident, 16 KiB)
    out_ref:     (tile, H)   f32    natural row-major output block
    onehot_ref:  (128, tile) f32    VMEM scratch holding the transposed multi-hot
    """
    idx = idx_ref[...]
    tile = idx.shape[1]

    # ---- multi-hot build: per-field sublane slabs (review opt #2) ----------
    # Field ranges are disjoint by construction; each field only touches its own
    # (slab, tile) rows of the scratch, so the VALU footprint is ~2x112 sublane
    # rows per tile instead of 8x128.  A single iota of the largest slab is
    # sliced per field (review opt #8).
    iota = jax.lax.broadcasted_iota(jnp.int32, (SLAB_SIZES[0], tile), 0)
    for c in range(4):
        off, size = SLAB_OFFSETS[c], SLAB_SIZES[c]
        onehot_ref[off:off + size, :] = (
            iota[:size, :] == idx[c:c + 1, :]).astype(jnp.float32)

    # Pad rows [112, 128): the matching table columns are zero, but uninitialized
    # VMEM could hold NaN/Inf (0 * NaN = NaN), so they must be written.  Zero them
    # every step (2 vreg stores) rather than under pl.when(program_id == 0): with a
    # "parallel" grid axis a v7x TensorCore may start at a nonzero program_id and
    # would otherwise never initialize its private scratch.
    onehot_ref[TOTAL_SLAB:, :] = jnp.zeros(
        (COMBINED_VOCAB - TOTAL_SLAB, tile), jnp.float32)

    # ---- one MXU matmul: sum of 4 lookups == table_T @ multi_hot_T ---------
    # Orientation keeps N = tile (full MXU output width); M is only H = 32.
    # Relies on Mosaic's default (accurate) f32 matmul path to match the f32
    # gather+add reference within 1e-5 (verified).
    out_t = jnp.dot(table_t_ref[...], onehot_ref[...],
                    preferred_element_type=jnp.float32)          # (H, tile)

    # ---- natural row-major store (review opt #1) ---------------------------
    # The (H, tile) -> (tile, H) relayout runs on the otherwise-idle XLU, which
    # lets the wrapper return (B, S, H) with a free reshape — no separate XLA
    # transpose pass over the output array in HBM.
    out_ref[...] = out_t.T


def _choose_tile(n_rows, tile_n):
    """Lane-aligned row tile; prefer an even grid-step count (v7x has 2 TCs)."""
    n_aligned = pl.cdiv(n_rows, 128) * 128
    tile = max(128, min((tile_n // 128) * 128, n_aligned))
    n_grid = pl.cdiv(n_aligned, tile)
    if n_grid % 2 == 1 and n_aligned >= 256:
        n_grid += 1
        tile = max(128, pl.cdiv(pl.cdiv(n_aligned, n_grid), 128) * 128)
    return tile


def date_embeddings_pallas(date_ymdw, table_t, *, tile_n=2048):
    """date_ymdw: (B, S, 4) int; table_t: (H, 128) f32 transposed combined table.

    Returns (B, S, H) float32.  Intended to be called under jax.jit so the small
    index transpose/pad and the (optional) tail slice fuse with the caller.
    """
    B, S, _ = date_ymdw.shape
    H, vocab = table_t.shape
    N = B * S

    tile = _choose_tile(N, tile_n)
    n_grid = pl.cdiv(N, tile)
    N_pad = n_grid * tile

    # Lane-dense index layout: fields on sublanes, rows on lanes.  Padded rows
    # (value 0) yield valid embeddings in padded output rows, which are excluded
    # by the tail slice below — any future output-layout change must keep that.
    idx_t = date_ymdw.astype(jnp.int32).reshape(N, 4).T           # (4, N)
    if N_pad != N:
        idx_t = jnp.pad(idx_t, ((0, 0), (0, N_pad - N)))

    out = pl.pallas_call(
        date_emb_kernel,
        out_shape=jax.ShapeDtypeStruct((N_pad, H), jnp.float32),
        grid_spec=pltpu.PrefetchScalarGridSpec(
            num_scalar_prefetch=0,
            grid=(n_grid,),
            in_specs=[
                pl.BlockSpec((4, tile), lambda i: (0, i)),        # lane-dense indices
                pl.BlockSpec((H, vocab), lambda i: (0, 0)),       # resident table
            ],
            out_specs=pl.BlockSpec((tile, H), lambda i: (i, 0)),  # row-major output
            scratch_shapes=[pltpu.VMEM((vocab, tile), jnp.float32)],
        ),
        compiler_params=pltpu.CompilerParams(
            dimension_semantics=("parallel",)),
    )(idx_t, table_t)

    if N_pad != N:
        out = out[:N]          # contiguous prefix slice; free when N is aligned
    return out.reshape(B, S, H)


def make_params(key, hidden_size):
    """N(0,1) init matching nn.Embedding defaults.  Returns the 4 per-field tables
    (for the reference) and the combined (H, 128) transposed table laid out with
    sublane-aligned field slabs (0/56/72/104) and zero padding elsewhere."""
    keys = jax.random.split(key, 4)
    tables = [jax.random.normal(k, (v, hidden_size), dtype=jnp.float32)
              for k, v in zip(keys, VOCAB_SIZES)]
    combined = jnp.zeros((COMBINED_VOCAB, hidden_size), jnp.float32)
    for t, off in zip(tables, SLAB_OFFSETS):
        combined = combined.at[off:off + t.shape[0]].set(t)
    return tables, combined.T                                     # (H, 128)


def reference_forward(date_ymdw, tables):
    """Pure-JAX reference of the PyTorch forward."""
    y = tables[0][date_ymdw[:, :, 0]]
    m = tables[1][date_ymdw[:, :, 1]]
    d = tables[2][date_ymdw[:, :, 2]]
    w = tables[3][date_ymdw[:, :, 3]]
    return y + m + d + w


if __name__ == "__main__":
    key = jax.random.PRNGKey(0)
    k_params, k_y, k_m, k_d, k_w = jax.random.split(key, 5)

    tables, table_t = make_params(k_params, HIDDEN)

    B, S = 2, 8
    year = jax.random.randint(k_y, (B, S, 1), 0, VOCAB_SIZES[0], dtype=jnp.int32)
    month = jax.random.randint(k_m, (B, S, 1), 0, VOCAB_SIZES[1], dtype=jnp.int32)
    day = jax.random.randint(k_d, (B, S, 1), 0, VOCAB_SIZES[2], dtype=jnp.int32)
    wday = jax.random.randint(k_w, (B, S, 1), 0, VOCAB_SIZES[3], dtype=jnp.int32)
    date_ymdw = jnp.concatenate([year, month, day, wday], axis=-1)  # (B, S, 4)

    fwd = jax.jit(date_embeddings_pallas)
    out = jax.block_until_ready(fwd(date_ymdw, table_t))

    ref = reference_forward(date_ymdw, tables)
    assert out.shape == (B, S, HIDDEN)
    assert jnp.allclose(out, ref, atol=1e-5, rtol=1e-5), "mismatch vs reference"

    print("KERNEL_OK")
</pallas_src>

<mosaic_0001>
module attributes {stable_mosaic.version = 11 : i64} {
  func.func @date_emb_kernel(%arg0: i32, %arg1: memref<4x128xi32, #tpu.memory_space<vmem>>, %arg2: memref<32x128xf32, #tpu.memory_space<vmem>>, %arg3: memref<128x32xf32, #tpu.memory_space<vmem>>, %arg4: memref<128x128xf32, #tpu.memory_space<vmem>>) attributes {dimension_semantics = [#tpu.dimension_semantics<parallel>], iteration_bounds = array<i64: 1>, scalar_prefetch = 0 : i64, scratch_operands = 1 : i64, tpu.core_type = #tpu.core_type<tc>, window_params = [{transform_indices = @transform_0, window_bounds = array<i64: 4, 128>}, {pipeline_mode = #tpu.pipeline_mode<synchronous>, transform_indices = @transform_1, window_bounds = array<i64: 32, 128>}, {transform_indices = @transform_2, window_bounds = array<i64: 128, 32>}]} {
    %c0 = arith.constant 0 : index
    %c0_0 = arith.constant 0 : index
    %0 = vector.load %arg1[%c0, %c0_0] : memref<4x128xi32, #tpu.memory_space<vmem>>, vector<4x128xi32>
    %1 = tpu.iota {dimensions = array<i32: 0>} : vector<56x128xi32>
    %2 = vector.extract_strided_slice %0 {offsets = [0, 0], sizes = [1, 128], strides = [1, 1]} : vector<4x128xi32> to vector<1x128xi32>
    %3 = vector.broadcast %2 : vector<1x128xi32> to vector<56x128xi32>
    %4 = arith.cmpi eq, %1, %3 : vector<56x128xi32>
    %5 = arith.extui %4 : vector<56x128xi1> to vector<56x128xi32>
    %6 = arith.sitofp %5 : vector<56x128xi32> to vector<56x128xf32>
    %c0_1 = arith.constant 0 : index
    %c0_2 = arith.constant 0 : index
    %7 = vector.load %arg4[%c0_1, %c0_2] : memref<128x128xf32, #tpu.memory_space<vmem>>, vector<56x128xf32>
    tpu.vector_store %arg4[%c0_1, %c0_2], %6 {strides = array<i32>} : memref<128x128xf32, #tpu.memory_space<vmem>>, vector<56x128xf32>,
    %8 = vector.extract_strided_slice %1 {offsets = [0, 0], sizes = [16, 128], strides = [1, 1]} : vector<56x128xi32> to vector<16x128xi32>
    %9 = vector.extract_strided_slice %0 {offsets = [1, 0], sizes = [1, 128], strides = [1, 1]} : vector<4x128xi32> to vector<1x128xi32>
    %10 = vector.broadcast %9 : vector<1x128xi32> to vector<16x128xi32>
    %11 = arith.cmpi eq, %8, %10 : vector<16x128xi32>
    %12 = arith.extui %11 : vector<16x128xi1> to vector<16x128xi32>
    %13 = arith.sitofp %12 : vector<16x128xi32> to vector<16x128xf32>
    %c56 = arith.constant 56 : index
    %c0_3 = arith.constant 0 : index
    %14 = vector.load %arg4[%c56, %c0_3] : memref<128x128xf32, #tpu.memory_space<vmem>>, vector<16x128xf32>
    tpu.vector_store %arg4[%c56, %c0_3], %13 {strides = array<i32>} : memref<128x128xf32, #tpu.memory_space<vmem>>, vector<16x128xf32>,
    %15 = vector.extract_strided_slice %1 {offsets = [0, 0], sizes = [32, 128], strides = [1, 1]} : vector<56x128xi32> to vector<32x128xi32>
    %16 = vector.extract_strided_slice %0 {offsets = [2, 0], sizes = [1, 128], strides = [1, 1]} : vector<4x128xi32> to vector<1x128xi32>
    %17 = vector.broadcast %16 : vector<1x128xi32> to vector<32x128xi32>
    %18 = arith.cmpi eq, %15, %17 : vector<32x128xi32>
    %19 = arith.extui %18 : vector<32x128xi1> to vector<32x128xi32>
    %20 = arith.sitofp %19 : vector<32x128xi32> to vector<32x128xf32>
    %c72 = arith.constant 72 : index
    %c0_4 = arith.constant 0 : index
    %21 = vector.load %arg4[%c72, %c0_4] : memref<128x128xf32, #tpu.memory_space<vmem>>, vector<32x128xf32>
    tpu.vector_store %arg4[%c72, %c0_4], %20 {strides = array<i32>} : memref<128x128xf32, #tpu.memory_space<vmem>>, vector<32x128xf32>,
    %22 = vector.extract_strided_slice %1 {offsets = [0, 0], sizes = [8, 128], strides = [1, 1]} : vector<56x128xi32> to vector<8x128xi32>
    %23 = vector.extract_strided_slice %0 {offsets = [3, 0], sizes = [1, 128], strides = [1, 1]} : vector<4x128xi32> to vector<1x128xi32>
    %24 = vector.broadcast %23 : vector<1x128xi32> to vector<8x128xi32>
    %25 = arith.cmpi eq, %22, %24 : vector<8x128xi32>
    %26 = arith.extui %25 : vector<8x128xi1> to vector<8x128xi32>
    %27 = arith.sitofp %26 : vector<8x128xi32> to vector<8x128xf32>
    %c104 = arith.constant 104 : index
    %c0_5 = arith.constant 0 : index
    %28 = vector.load %arg4[%c104, %c0_5] : memref<128x128xf32, #tpu.memory_space<vmem>>, vector<8x128xf32>
    tpu.vector_store %arg4[%c104, %c0_5], %27 {strides = array<i32>} : memref<128x128xf32, #tpu.memory_space<vmem>>, vector<8x128xf32>,
    %cst = arith.constant 0.000000e+00 : f32
    %29 = vector.broadcast %cst : f32 to vector<16x128xf32>
    %c112 = arith.constant 112 : index
    %c0_6 = arith.constant 0 : index
    %30 = vector.load %arg4[%c112, %c0_6] : memref<128x128xf32, #tpu.memory_space<vmem>>, vector<16x128xf32>
    tpu.vector_store %arg4[%c112, %c0_6], %29 {strides = array<i32>} : memref<128x128xf32, #tpu.memory_space<vmem>>, vector<16x128xf32>,
    %c0_7 = arith.constant 0 : index
    %c0_8 = arith.constant 0 : index
    %31 = vector.load %arg2[%c0_7, %c0_8] : memref<32x128xf32, #tpu.memory_space<vmem>>, vector<32x128xf32>
    %c0_9 = arith.constant 0 : index
    %c0_10 = arith.constant 0 : index
    %32 = vector.load %arg4[%c0_9, %c0_10] : memref<128x128xf32, #tpu.memory_space<vmem>>, vector<128x128xf32>
    %cst_11 = arith.constant dense<0.000000e+00> : vector<32x128xf32>
    %33 = tpu.matmul %31, %32, %cst_11 {dimension_numbers = #tpu.dot_dimension_numbers<[1], [0], [0], [1], [0, 0, 1, 1], [], []>} : vector<32x128xf32>, vector<128x128xf32>, vector<32x128xf32> -> vector<32x128xf32>
    %34 = tpu.transpose %33, [1, 0] : vector<32x128xf32> -> vector<128x32xf32>
    %c0_12 = arith.constant 0 : index
    %c0_13 = arith.constant 0 : index
    %35 = vector.load %arg3[%c0_12, %c0_13] : memref<128x32xf32, #tpu.memory_space<vmem>>, vector<128x32xf32>
    tpu.vector_store %arg3[%c0_12, %c0_13], %34 {strides = array<i32>} : memref<128x32xf32, #tpu.memory_space<vmem>>, vector<128x32xf32>,
    return
  }
  func.func @transform_0(%arg0: i32) -> (i32, i32) {
    %c0_i32 = arith.constant 0 : i32
    %c0_i32_0 = arith.constant 0 : i32
    return %c0_i32, %arg0 : i32, i32
  }
  func.func @transform_1(%arg0: i32) -> (i32, i32) {
    %c0_i32 = arith.constant 0 : i32
    %c0_i32_0 = arith.constant 0 : i32
    %c0_i32_1 = arith.constant 0 : i32
    return %c0_i32, %c0_i32_0 : i32, i32
  }
  func.func @transform_2(%arg0: i32) -> (i32, i32) {
    %c0_i32 = arith.constant 0 : i32
    %c0_i32_0 = arith.constant 0 : i32
    return %arg0, %c0_i32 : i32, i32
  }
}

</mosaic_0001>

<llo_original>
// kernel: date_embeddings_pallas.1
$region0: #{date_embeddings_pallas.1}
  #allocation0 [shape = 'u32[]', space=smem, size = 0x4, offset = 0x4, fixed_abs, tag = 'smem constant byte address 0x4 - core index']
  #allocation1 [shape = 'u32[144,128]{1,0:T(1,128)}', space=vmem, size = 0x12000, scoped, tag = 'internal scratch']
  #allocation2 [shape = 'f32[128,128]{1,0:T(8,128)}', space=vmem, size = 0x10000, scoped, tag = 'scratch operand']
  %s0 = inlined_call_operand.vmem [shape: s32[4,128], index: 0, kind: input, shape index: {}]
  %s1 = inlined_call_operand.vmem [shape: f32[32,128], index: 1, kind: input, shape index: {}]
  %s2 = inlined_call_operand.vmem [shape: f32[128,32], index: 2, kind: output, shape index: {}]
  %s3 = sld [smem:[#allocation0]]
  $region18: #{date_embeddings_pallas.1} parent=0
    _
  %s5 = ssub.s32 1, %s3
  %s6 = scalar_select 0, %s5, %s3
  // Predicated region
  $region2: #{date_embeddings_pallas.1} parent=0 // pred_check
    _
  $region3: #{date_embeddings_pallas.1} parent=0 // pred_check_branch
    %8 = sbr.rel (0) target = $region5
  $region4: #{date_embeddings_pallas.1} parent=0 // pred_region
    _
  $region5: #{date_embeddings_pallas.1} parent=0 // pred_fallthru
    _
  // Predicated region
  $region6: #{date_embeddings_pallas.1} parent=0 // pred_check
    _
  $region7: #{date_embeddings_pallas.1} parent=0 // pred_check_branch
    %10 = sbr.rel (0) target = $region9
  $region8: #{date_embeddings_pallas.1} parent=0 // pred_region
    _
  $region9: #{date_embeddings_pallas.1} parent=0 // pred_fallthru
    _
  %v11 = vld [vmem:[%s0] sm:$0xf]
  %v12 = vlaneseq
  %v13 = vshrl.u32 %v12, 7
  %v14 = vadd.s32 %v13, 8
  %v15 = vadd.s32 %v13, 16
  %v16 = vadd.s32 %v13, 24
  %v17 = vadd.s32 %v13, 32
  %v18 = vadd.s32 %v13, 40
  %v19 = vadd.s32 %v13, 48
  %v20 = vlaneseq
  %v21 = vshrl.u32 %v20, 7
  %v22 = vsub.s32 0, %v21
  %v23 = vrot.slane %v11, %v22
  %vm24 = vcmp.eq.s32.totalorder %v13, %v23
  %vm25 = vcmp.eq.s32.totalorder %v14, %v23
  %vm26 = vcmp.eq.s32.totalorder %v15, %v23
  %vm27 = vcmp.eq.s32.totalorder %v16, %v23
  %vm28 = vcmp.eq.s32.totalorder %v17, %v23
  %vm29 = vcmp.eq.s32.totalorder %v18, %v23
  %vm30 = vcmp.eq.s32.totalorder %v19, %v23
  %v31 = vsel %vm24, 1, 0
  %v32 = vsel %vm25, 1, 0
  %v33 = vsel %vm26, 1, 0
  %v34 = vsel %vm27, 1, 0
  %v35 = vsel %vm28, 1, 0
  %v36 = vsel %vm29, 1, 0
  %v37 = vsel %vm30, 1, 0
  %v38 = vcvt.s32.f32 %v31
  %v39 = vcvt.s32.f32 %v32
  %v40 = vcvt.s32.f32 %v33
  %v41 = vcvt.s32.f32 %v34
  %v42 = vcvt.s32.f32 %v35
  %v43 = vcvt.s32.f32 %v36
  %v44 = vcvt.s32.f32 %v37
  %45 = vst [vmem:[#allocation2] sm:$0xff] %v38
  %46 = vst [vmem:[#allocation2 + $0x8] sm:$0xff] %v39
  %47 = vst [vmem:[#allocation2 + $0x10] sm:$0xff] %v40
  %48 = vst [vmem:[#allocation2 + $0x18] sm:$0xff] %v41
  %49 = vst [vmem:[#allocation2 + $0x20] sm:$0xff] %v42
  %50 = vst [vmem:[#allocation2 + $0x28] sm:$0xff] %v43
  %51 = vst [vmem:[#allocation2 + $0x30] sm:$0xff] %v44
  %v52 = vlaneseq
  %v53 = vshrl.u32 %v52, 7
  %v54 = vsub.s32 1, %v53
  %v55 = vrot.slane %v11, %v54
  %vm56 = vcmp.eq.s32.totalorder %v13, %v55
  %vm57 = vcmp.eq.s32.totalorder %v14, %v55
  %v58 = vsel %vm56, 1, 0
  %v59 = vsel %vm57, 1, 0
  %v60 = vcvt.s32.f32 %v58
  %v61 = vcvt.s32.f32 %v59
  %62 = vst [vmem:[#allocation2 + $0x38] sm:$0xff] %v60
  %63 = vst [vmem:[#allocation2 + $0x40] sm:$0xff] %v61
  %v64 = vlaneseq
  %v65 = vshrl.u32 %v64, 7
  %v66 = vsub.s32 2, %v65
  %v67 = vrot.slane %v11, %v66
  %vm68 = vcmp.eq.s32.totalorder %v13, %v67
  %vm69 = vcmp.eq.s32.totalorder %v14, %v67
  %vm70 = vcmp.eq.s32.totalorder %v15, %v67
  %vm71 = vcmp.eq.s32.totalorder %v16, %v67
  %v72 = vsel %vm68, 1, 0
  %v73 = vsel %vm69, 1, 0
  %v74 = vsel %vm70, 1, 0
  %v75 = vsel %vm71, 1, 0
  %v76 = vcvt.s32.f32 %v72
  %v77 = vcvt.s32.f32 %v73
  %v78 = vcvt.s32.f32 %v74
  %v79 = vcvt.s32.f32 %v75
  %80 = vst [vmem:[#allocation2 + $0x48] sm:$0xff] %v76
  %81 = vst [vmem:[#allocation2 + $0x50] sm:$0xff] %v77
  %82 = vst [vmem:[#allocation2 + $0x58] sm:$0xff] %v78
  %83 = vst [vmem:[#allocation2 + $0x60] sm:$0xff] %v79
  %v84 = vlaneseq
  %v85 = vshrl.u32 %v84, 7
  %v86 = vsub.s32 3, %v85
  %v87 = vrot.slane %v11, %v86
  %vm88 = vcmp.eq.s32.totalorder %v13, %v87
  %v89 = vsel %vm88, 1, 0
  %v90 = vcvt.s32.f32 %v89
  %91 = vst [vmem:[#allocation2 + $0x68] sm:$0xff] %v90
  %92 = vst [vmem:[#allocation2 + $0x70] sm:$0xff] 0.0
  %93 = vst [vmem:[#allocation2 + $0x78] sm:$0xff] 0.0
  %v94 = vld [vmem:[%s1] sm:$0xff]
  %v95 = vld [vmem:[%s1 + $0x8] sm:$0xff]
  %v96 = vld [vmem:[%s1 + $0x10] sm:$0xff]
  %v97 = vld [vmem:[%s1 + $0x18] sm:$0xff]
  %v98 = vld [vmem:[#allocation2] sm:$0xff]
  %v99 = vld [vmem:[#allocation2 + $0x8] sm:$0xff]
  %v100 = vld [vmem:[#allocation2 + $0x10] sm:$0xff]
  %v101 = vld [vmem:[#allocation2 + $0x18] sm:$0xff]
  %v102 = vld [vmem:[#allocation2 + $0x20] sm:$0xff]
  %v103 = vld [vmem:[#allocation2 + $0x28] sm:$0xff]
  %v104 = vld [vmem:[#allocation2 + $0x30] sm:$0xff]
  %v105 = vld [vmem:[#allocation2 + $0x38] sm:$0xff]
  %v106 = vld [vmem:[#allocation2 + $0x40] sm:$0xff]
  %v107 = vld [vmem:[#allocation2 + $0x48] sm:$0xff]
  %v108 = vld [vmem:[#allocation2 + $0x50] sm:$0xff]
  %v109 = vld [vmem:[#allocation2 + $0x58] sm:$0xff]
  %v110 = vld [vmem:[#allocation2 + $0x60] sm:$0xff]
  %v111 = vld [vmem:[#allocation2 + $0x68] sm:$0xff]
  %v112 = vld [vmem:[#allocation2 + $0x70] sm:$0xff]
  %v113 = vld [vmem:[#allocation2 + $0x78] sm:$0xff]
  %114 = vmatprep.subr.mxu0 0.0
  %115 = vmatpush1.msra.mxu0 %v98
  %116 = vmatprep.subr.mxu0 0.0
  %117 = vmatpush1.msra.mxu0 %v99
  %118 = vmatprep.subr.mxu0 0.0
  %119 = vmatpush1.msra.mxu0 %v100
  %120 = vmatprep.subr.mxu0 0.0
  %121 = vmatpush1.msra.mxu0 %v101
  %122 = vmatprep.subr.mxu0 0.0
  %123 = vmatpush1.msra.mxu0 %v102
  %124 = vmatprep.subr.mxu0 0.0
  %125 = vmatpush1.msra.mxu0 %v103
  %126 = vmatprep.subr.mxu0 0.0
  %127 = vmatpush1.msra.mxu0 %v104
  %128 = vmatprep.subr.mxu0 0.0
  %129 = vmatpush1.msra.mxu0 %v105
  %130 = vmatprep.subr.mxu0 0.0
  %131 = vmatpush1.msra.mxu0 %v106
  %132 = vmatprep.subr.mxu0 0.0
  %133 = vmatpush1.msra.mxu0 %v107
  %134 = vmatprep.subr.mxu0 0.0
  %135 = vmatpush1.msra.mxu0 %v108
  %136 = vmatprep.subr.mxu0 0.0
  %137 = vmatpush1.msra.mxu0 %v109
  %138 = vmatprep.subr.mxu0 0.0
  %139 = vmatpush1.msra.mxu0 %v110
  %140 = vmatprep.subr.mxu0 0.0
  %141 = vmatpush1.msra.mxu0 %v111
  %142 = vmatprep.subr.mxu0 0.0
  %143 = vmatpush1.msra.mxu0 %v112
  %144 = vmatprep.subr.mxu0 0.0
  %145 = vmatpush1.msra.mxu0 %v113
  %146 = vmatprep.subr.mxu0 0.0
  %147 = vmatpush1.msra.mxu0 0.0
  %148 = vmatprep.subr.mxu0 0.0
  %149 = vmatpush1.msra.mxu0 0.0
  %150 = vmatprep.subr.mxu0 0.0
  %151 = vmatpush1.msra.mxu0 0.0
  %152 = vmatprep.subr.mxu0 0.0
  %153 = vmatpush1.msra.mxu0 0.0
  %154 = vmatprep.subr.mxu0 0.0
  %155 = vmatpush1.msra.mxu0 0.0
  %156 = vmatprep.subr.mxu0 0.0
  %157 = vmatpush1.msra.mxu0 0.0
  %158 = vmatprep.subr.mxu0 0.0
  %159 = vmatpush1.msra.mxu0 0.0
  %160 = vmatprep.subr.mxu0 0.0
  %161 = vmatpush1.msra.mxu0 0.0
  %162 = vmatprep.subr.mxu0 0.0
  %163 = vmatpush1.msra.mxu0 0.0
  %164 = vmatprep.subr.mxu0 0.0
  %165 = vmatpush1.msra.mxu0 0.0
  %166 = vmatprep.subr.mxu0 0.0
  %167 = vmatpush1.msra.mxu0 0.0
  %168 = vmatprep.subr.mxu0 0.0
  %169 = vmatpush1.msra.mxu0 0.0
  %170 = vmatprep.subr.mxu0 0.0
  %171 = vmatpush1.msra.mxu0 0.0
  %172 = vmatprep.subr.mxu0 0.0
  %173 = vmatpush1.msra.mxu0 0.0
  %174 = vmatprep.subr.mxu0 0.0
  %175 = vmatpush1.msra.mxu0 0.0
  %176 = vmatprep.subr.mxu0 0.0
  %177 = vmatpush1.msra.mxu0 0.0
  %178 = vmatprep.mubr.f32.mxu0 0.0
  %179 = vmatmul.mubr.f32.gmra.mrb[0].mxu0 %v94
  %v180 = vpop.f32.mrb[0].mxu0
  %v181 = vadd.f32 0.0, %v180
  %v182 = vpop.f32.mrb[0].mxu0
  %183 = vmatprep.mubr.f32.mxu0 0.0
  %184 = vmatmul.mubr.f32.gmra.mrb[0].mxu0 %v95
  %v185 = vpop.f32.mrb[0].mxu0
  %v186 = vadd.f32 0.0, %v185
  %v187 = vpop.f32.mrb[0].mxu0
  %188 = vmatprep.mubr.f32.mxu0 0.0
  %189 = vmatmul.mubr.f32.gmra.mrb[0].mxu0 %v96
  %v190 = vpop.f32.mrb[0].mxu0
  %v191 = vadd.f32 0.0, %v190
  %v192 = vpop.f32.mrb[0].mxu0
  %193 = vmatprep.mubr.f32.mxu0 0.0
  %194 = vmatmul.mubr.f32.gmra.mrb[0].mxu0 %v97
  %v195 = vpop.f32.mrb[0].mxu0
  %v196 = vadd.f32 0.0, %v195
  %v197 = vpop.f32.mrb[0].mxu0
  %198 = vdwg.mxu0
  %199 = vxpose.xlu0.b32.start [1/16] %v181, 128
  %200 = vxpose.xlu0.b32.cont [2/16] %v186, 128
  %201 = vxpose.xlu0.b32.cont [3/16] %v191, 128
  %202 = vxpose.xlu0.b32.cont [4/16] %v196, 128
  %203 = vxpose.xlu0.b32.cont [5/16] 0.0, 128
  %204 = vxpose.xlu0.b32.cont [6/16] 0.0, 128
  %205 = vxpose.xlu0.b32.cont [7/16] 0.0, 128
  %206 = vxpose.xlu0.b32.cont [8/16] 0.0, 128
  %207 = vxpose.xlu0.b32.cont [9/16] 0.0, 128
  %208 = vxpose.xlu0.b32.cont [10/16] 0.0, 128
  %209 = vxpose.xlu0.b32.cont [11/16] 0.0, 128
  %210 = vxpose.xlu0.b32.cont [12/16] 0.0, 128
  %211 = vxpose.xlu0.b32.cont [13/16] 0.0, 128
  %212 = vxpose.xlu0.b32.cont [14/16] 0.0, 128
  %213 = vxpose.xlu0.b32.cont [15/16] 0.0, 128
  %214 = vxpose.xlu0.b32.end [16/16] 0.0, 128
  %v215 = vpop.trf.xlu0
  %v216 = vpop.trf.xlu0
  %v217 = vpop.trf.xlu0
  %v218 = vpop.trf.xlu0
  %v219 = vpop.trf.xlu0
  %v220 = vpop.trf.xlu0
  %v221 = vpop.trf.xlu0
  %v222 = vpop.trf.xlu0
  %v223 = vpop.trf.xlu0
  %v224 = vpop.trf.xlu0
  %v225 = vpop.trf.xlu0
  %v226 = vpop.trf.xlu0
  %v227 = vpop.trf.xlu0
  %v228 = vpop.trf.xlu0
  %v229 = vpop.trf.xlu0
  %v230 = vpop.trf.xlu0
  %vm231 = vcmask 261120
  %232 = vst.msk [vmem:[%s2] sm:$0xff] %vm231, %v215
  %233 = vst.msk [vmem:[%s2 + $0x8] sm:$0xff] %vm231, %v216
  %234 = vst.msk [vmem:[%s2 + $0x10] sm:$0xff] %vm231, %v217
  %235 = vst.msk [vmem:[%s2 + $0x18] sm:$0xff] %vm231, %v218
  %236 = vst.msk [vmem:[%s2 + $0x20] sm:$0xff] %vm231, %v219
  %237 = vst.msk [vmem:[%s2 + $0x28] sm:$0xff] %vm231, %v220
  %238 = vst.msk [vmem:[%s2 + $0x30] sm:$0xff] %vm231, %v221
  %239 = vst.msk [vmem:[%s2 + $0x38] sm:$0xff] %vm231, %v222
  %240 = vst.msk [vmem:[%s2 + $0x40] sm:$0xff] %vm231, %v223
  %241 = vst.msk [vmem:[%s2 + $0x48] sm:$0xff] %vm231, %v224
  %242 = vst.msk [vmem:[%s2 + $0x50] sm:$0xff] %vm231, %v225
  %243 = vst.msk [vmem:[%s2 + $0x58] sm:$0xff] %vm231, %v226
  %244 = vst.msk [vmem:[%s2 + $0x60] sm:$0xff] %vm231, %v227
  %245 = vst.msk [vmem:[%s2 + $0x68] sm:$0xff] %vm231, %v228
  %246 = vst.msk [vmem:[%s2 + $0x70] sm:$0xff] %vm231, %v229
  %247 = vst.msk [vmem:[%s2 + $0x78] sm:$0xff] %vm231, %v230
  // Predicated region
  $region10: #{date_embeddings_pallas.1} parent=0 // pred_check
    _
  $region11: #{date_embeddings_pallas.1} parent=0 // pred_check_branch
    %249 = sbr.rel (0) target = $region13
  $region12: #{date_embeddings_pallas.1} parent=0 // pred_region
    _
  $region13: #{date_embeddings_pallas.1} parent=0 // pred_fallthru
    _
  // Predicated region
  $region14: #{date_embeddings_pallas.1} parent=0 // pred_check
    _
  $region15: #{date_embeddings_pallas.1} parent=0 // pred_check_branch
    %251 = sbr.rel (0) target = $region17
  $region16: #{date_embeddings_pallas.1} parent=0 // pred_region
    _
  $region17: #{date_embeddings_pallas.1} parent=0 // pred_fallthru
    _

</llo_original>
